<compile_context>
chip_gen: v7x
topology: tpu7x:2x2x1
jax: 0.10.0
libtpu: 0.0.40
codegen_flags: <defaults>
</compile_context>

<pallas_src>
import jax
import jax.numpy as jnp
from jax.experimental import pallas as pl
from jax.experimental.pallas import tpu as pltpu


def _round_up(x: int, m: int) -> int:
    return ((x + m - 1) // m) * m


def _encoder_stack_kernel(idx_ref, aug_table_ref, out_ref):
    # idx_ref:       [TB, 1]                          int32 (VMEM block)
    # aug_table_ref: [num_values, emb_dim+num_values] f32   (whole-resident,
    #                single-buffered VMEM; columns = [embedding_table | I])
    # out_ref:       [TB, emb_dim+num_values]         f32   fused output block
    idx = idx_ref[...]                                   # [TB, 1]
    tb = idx.shape[0]
    num_values = aug_table_ref.shape[0]

    # one-hot codes: broadcast-compare against a lane iota (pure VPU)
    lane = jax.lax.broadcasted_iota(jnp.int32, (tb, num_values), 1)
    one_hot = (lane == idx).astype(jnp.float32)          # [TB, num_values]

    # Row gather + one-hot placement in a single MXU matmul:
    #   one_hot @ [table | I]  ==  [emb | one_hot]
    # -> one full-width, lane-dense store of the fused result.
    out_ref[...] = jnp.dot(one_hot, aug_table_ref[...],
                           preferred_element_type=jnp.float32)


def encoder_stack_forward(categorical_column: jax.Array,
                          embedding_table: jax.Array,
                          *, tile_b: int | None = None) -> jax.Array:
    """categorical_column: [B] int; embedding_table: [num_values, emb_dim] f32.

    Returns [B, emb_dim + num_values] = concat(embedding, one_hot) in
    sorted-key order ("embedding" < "one_hot").
    """
    b = categorical_column.shape[0]
    num_values, emb_dim = embedding_table.shape
    fused_dim = emb_dim + num_values

    b_pad8 = _round_up(b, 8)

    # --- batch tile selection --------------------------------------------
    row_bytes = fused_dim * 4
    if tile_b is None:
        # amortize ~0.35 us per-grid-step overhead: >= ~1 MiB output per tile
        tile_b = max(512, _round_up(pl.cdiv(1 << 20, row_bytes), 8))

    tb = max(8, (min(tile_b, b_pad8) // 8) * 8)

    # explicit VMEM budget: 2x output tile (double-buffered) + 2x index tile
    # (lane-padded to 128) + working set (~one_hot tile) + table (one copy)
    table_bytes = num_values * fused_dim * 4

    def _tile_bytes(t: int) -> int:
        out_bytes = 2 * t * fused_dim * 4
        idx_bytes = 2 * t * 128 * 4
        work_bytes = 2 * t * max(num_values, fused_dim) * 4
        return out_bytes + idx_bytes + work_bytes

    vmem_budget = 24 * 1024 * 1024
    while tb > 8 and table_bytes + _tile_bytes(tb) > vmem_budget:
        tb = max(8, ((tb // 2) // 8) * 8)

    # keep >= 2 tiles so the "parallel" grid axis spans both v7x TensorCores
    if b_pad8 > 8:
        tb = min(tb, max(8, _round_up(pl.cdiv(b_pad8, 2), 8)))

    n_tiles = pl.cdiv(b_pad8, tb)
    b_padded = n_tiles * tb

    vmem_limit = int(min(max(table_bytes + _tile_bytes(tb) + (4 << 20),
                             32 * 1024 * 1024),
                         48 * 1024 * 1024))

    # --- operands ----------------------------------------------------------
    idx2d = categorical_column.reshape(b, 1).astype(jnp.int32)
    if b_padded != b:
        # sentinel index == num_values -> all-zero one-hot row -> zero output
        # row (safe because the lookup is compare+matmul, not a real gather).
        idx2d = jnp.pad(idx2d, ((0, b_padded - b), (0, 0)),
                        constant_values=num_values)

    # augmented table [table | I]: small (num_values rows), built once per
    # call; constant-folds under jit when the table is a fixed parameter.
    aug_table = jnp.concatenate(
        [embedding_table.astype(jnp.float32),
         jnp.eye(num_values, dtype=jnp.float32)], axis=1)

    out = pl.pallas_call(
        _encoder_stack_kernel,
        out_shape=jax.ShapeDtypeStruct((b_padded, fused_dim), jnp.float32),
        grid=(n_tiles,),
        in_specs=[
            pl.BlockSpec((tb, 1), lambda i: (i, 0)),                # indices
            pl.BlockSpec(memory_space=pltpu.MemorySpace.VMEM),      # table
        ],
        out_specs=pl.BlockSpec((tb, fused_dim), lambda i: (i, 0)),  # fused out
        compiler_params=pltpu.CompilerParams(
            dimension_semantics=("parallel",),
            vmem_limit_bytes=vmem_limit),
    )(idx2d, aug_table)

    if b_padded != b:
        out = out[:b]
    return out


def _reference(categorical_column, embedding_table):
    num_values, _ = embedding_table.shape
    one_hot = jax.nn.one_hot(categorical_column, num_values, dtype=jnp.float32)
    emb = embedding_table[categorical_column]
    return jnp.concatenate([emb, one_hot], axis=1)


if __name__ == "__main__":
    key = jax.random.PRNGKey(0)
    k_idx, k_emb = jax.random.split(key)

    num_values = 16       # cardinality of the categorical column
    embedding_dim = 32    # "embedding" encoder dim

    embedding_table = jax.random.normal(
        k_emb, (num_values, embedding_dim), dtype=jnp.float32)

    # 1) evenly-tiled batch (no padding, two grid tiles -> pipelined path)
    batch = 16
    categorical_column = jax.random.randint(
        k_idx, (batch,), 0, num_values, dtype=jnp.int32)
    out = encoder_stack_forward(categorical_column, embedding_table, tile_b=8)
    out = jax.block_until_ready(out)
    ref = _reference(categorical_column, embedding_table)
    assert out.shape == (batch, embedding_dim + num_values), out.shape
    assert jnp.allclose(out, ref, atol=1e-5), "mismatch vs reference (even)"

    # 2) ragged batch (exercises sentinel padding + trailing slice)
    batch2 = 13
    categorical_column2 = categorical_column[:batch2]
    out2 = encoder_stack_forward(categorical_column2, embedding_table, tile_b=8)
    out2 = jax.block_until_ready(out2)
    ref2 = _reference(categorical_column2, embedding_table)
    assert out2.shape == (batch2, embedding_dim + num_values), out2.shape
    assert jnp.allclose(out2, ref2, atol=1e-5), "mismatch vs reference (padded)"

    print("KERNEL_OK")
</pallas_src>

<mosaic_0001>
module attributes {stable_mosaic.version = 11 : i64} {
  func.func @_encoder_stack_kernel(%arg0: i32, %arg1: memref<8x1xi32, #tpu.memory_space<vmem>>, %arg2: memref<16x48xf32, #tpu.memory_space<vmem>>, %arg3: memref<8x48xf32, #tpu.memory_space<vmem>>) attributes {dimension_semantics = [#tpu.dimension_semantics<parallel>], iteration_bounds = array<i64: 2>, scalar_prefetch = 0 : i64, scratch_operands = 0 : i64, tpu.core_type = #tpu.core_type<tc>, window_params = [{transform_indices = @transform_0, window_bounds = array<i64: 8, 1>}, {pipeline_mode = #tpu.pipeline_mode<synchronous>, transform_indices = @transform_1, window_bounds = array<i64: 16, 48>}, {transform_indices = @transform_2, window_bounds = array<i64: 8, 48>}]} {
    %c0 = arith.constant 0 : index
    %c0_0 = arith.constant 0 : index
    %0 = vector.load %arg1[%c0, %c0_0] : memref<8x1xi32, #tpu.memory_space<vmem>>, vector<8x1xi32>
    %1 = tpu.iota {dimensions = array<i32: 1>} : vector<8x16xi32>
    %2 = vector.broadcast %0 : vector<8x1xi32> to vector<8x16xi32>
    %3 = arith.cmpi eq, %1, %2 : vector<8x16xi32>
    %4 = arith.extui %3 : vector<8x16xi1> to vector<8x16xi32>
    %5 = arith.sitofp %4 : vector<8x16xi32> to vector<8x16xf32>
    %c0_1 = arith.constant 0 : index
    %c0_2 = arith.constant 0 : index
    %6 = vector.load %arg2[%c0_1, %c0_2] : memref<16x48xf32, #tpu.memory_space<vmem>>, vector<16x48xf32>
    %cst = arith.constant dense<0.000000e+00> : vector<8x48xf32>
    %7 = tpu.matmul %5, %6, %cst {dimension_numbers = #tpu.dot_dimension_numbers<[1], [0], [0], [1], [0, 0, 1, 1], [], []>} : vector<8x16xf32>, vector<16x48xf32>, vector<8x48xf32> -> vector<8x48xf32>
    %c0_3 = arith.constant 0 : index
    %c0_4 = arith.constant 0 : index
    %8 = vector.load %arg3[%c0_3, %c0_4] : memref<8x48xf32, #tpu.memory_space<vmem>>, vector<8x48xf32>
    tpu.vector_store %arg3[%c0_3, %c0_4], %7 {strides = array<i32>} : memref<8x48xf32, #tpu.memory_space<vmem>>, vector<8x48xf32>,
    return
  }
  func.func @transform_0(%arg0: i32) -> (i32, i32) {
    %c0_i32 = arith.constant 0 : i32
    %c0_i32_0 = arith.constant 0 : i32
    return %arg0, %c0_i32 : i32, i32
  }
  func.func @transform_1(%arg0: i32) -> (i32, i32) {
    %c0_i32 = arith.constant 0 : i32
    %c0_i32_0 = arith.constant 0 : i32
    %c0_i32_1 = arith.constant 0 : i32
    return %c0_i32, %c0_i32_0 : i32, i32
  }
  func.func @transform_2(%arg0: i32) -> (i32, i32) {
    %c0_i32 = arith.constant 0 : i32
    %c0_i32_0 = arith.constant 0 : i32
    return %arg0, %c0_i32 : i32, i32
  }
}

</mosaic_0001>

<llo_original>
// kernel: tpu_custom_call.1
$region0: #{tpu_custom_call.1}
  #allocation0 [shape = 'u32[]', space=smem, size = 0x4, offset = 0x4, fixed_abs, tag = 'smem constant byte address 0x4 - core index']
  #allocation1 [shape = 'u32[144,128]{1,0:T(1,128)}', space=vmem, size = 0x12000, scoped, tag = 'internal scratch']
  %s0 = inlined_call_operand.vmem [shape: s32[16,1], index: 0, kind: input, shape index: {}]
  %s1 = inlined_call_operand.vmem [shape: f32[16,48], index: 1, kind: input, shape index: {}]
  %s2 = inlined_call_operand.hbm [shape: f32[16,48], index: 2, kind: output, shape index: {}]
  %s3 = sld [smem:[#allocation0]]
  $region41: #{tpu_custom_call.1} parent=0
    _
  %s5 = ssub.s32 1, %s3
  %s6 = scalar_select 0, %s5, %s3
  $region1: #{tpu_custom_call.1} parent=0
    #allocation2 [shape = 'u8[8192]{0}', space=vmem, size = 0x2000, scoped, tag = 'output window, operand 0']
    #allocation3 [shape = 's32[2]{0}', space=sflag, size = 0x8, scoped, tag = 'scoped memory for tpu_custom_call.1']
    %7 = vsyncpa [#allocation3], 0
    %s8 = scalar_lea.sflag [#allocation3], 1
    %9 = vsyncpa %s8, 0
    loop: start=0, step=1, limit=4
    $region2: #{tpu_custom_call.1} parent=1 // loop_pre_header
      _
    $region3: #{tpu_custom_call.1} parent=1 // loop_header
      %s11 = sphi 0, %s15
      %p12 = scmp.ge.s32.totalorder %s11, 4
      %s21 = sphi 0, %s23
      %s24 = sphi 0, %s21
      %s25 = sphi 0, %s24
      %s41 = sphi 0, %s25
      %s45 = sphi 0, %s45
      %s47 = sphi 0, %s45
      %s48 = sphi 0, %s47
      %s62 = sphi 0, %s48
      %s68 = sphi 0, %s70
      %s71 = sphi 0, %s68
      %s72 = sphi 0, %s71
      %s88 = sphi 0, %s72
    $region4: #{tpu_custom_call.1} parent=1 // loop_header_branch
      %14 = sbr.rel (%p12) target = $region8
    $region5: #{tpu_custom_call.1} parent=1 // loop_body
      %s16 = ssub.s32 %s11, 1
      %s17 = ssub.s32 %s11, 2
      %s18 = sadd.s32 %s11, 1
      %s19 = ssub.s32 %s11, %s18
      %p20 = scmp.eq.s32.totalorder %s19, 0
      %s22 = sadd.s32 %s21, 1
      %s23 = scalar_select %p20, %s21, %s22
      %p26 = pneg %p20
      %p27 = scmp.eq.s32.totalorder %s11, 1
      %p28 = por %p26, %p27
      %p29 = scmp.ne.s32.totalorder %s21, %s24
      %p30 = scmp.eq.s32.totalorder %s11, 0
      %p31 = por %p29, %p30
      %p32 = scmp.ne.s32.totalorder %s21, %s24
      %p33 = scmp.eq.s32.totalorder %s16, 1
      %p34 = por %p32, %p33
      %p35 = scmp.ne.s32.totalorder %s24, %s25
      %p36 = scmp.eq.s32.totalorder %s16, 0
      %p37 = por %p35, %p36
      %p38 = scmp.ne.s32.totalorder %s24, %s25
      %p39 = scmp.eq.s32.totalorder %s17, 1
      %p40 = por %p38, %p39
      %p42 = scmp.ne.s32.totalorder %s25, %s41
      %p43 = scmp.eq.s32.totalorder %s17, 0
      %p44 = por %p42, %p43
      %s46 = sadd.s32 %s45, 1
      %p49 = scmp.eq.s32.totalorder %s11, 1
      %p50 = scmp.ne.s32.totalorder %s45, %s47
      %p51 = scmp.eq.s32.totalorder %s11, 0
      %p52 = por %p50, %p51
      %p53 = scmp.ne.s32.totalorder %s45, %s47
      %p54 = scmp.eq.s32.totalorder %s16, 1
      %p55 = por %p53, %p54
      %p56 = scmp.ne.s32.totalorder %s47, %s48
      %p57 = scmp.eq.s32.totalorder %s16, 0
      %p58 = por %p56, %p57
      %p59 = scmp.ne.s32.totalorder %s47, %s48
      %p60 = scmp.eq.s32.totalorder %s17, 1
      %p61 = por %p59, %p60
      %p63 = scmp.ne.s32.totalorder %s48, %s62
      %p64 = scmp.eq.s32.totalorder %s17, 0
      %p65 = por %p63, %p64
      %s66 = ssub.s32 %s11, %s18
      %p67 = scmp.eq.s32.totalorder %s66, 0
      %s69 = sadd.s32 %s68, 1
      %s70 = scalar_select %p67, %s68, %s69
      %p73 = pneg %p67
      %p74 = scmp.eq.s32.totalorder %s11, 1
      %p75 = por %p73, %p74
      %p76 = scmp.ne.s32.totalorder %s68, %s71
      %p77 = scmp.eq.s32.totalorder %s11, 0
      %p78 = por %p76, %p77
      %p79 = scmp.ne.s32.totalorder %s68, %s71
      %p80 = scmp.eq.s32.totalorder %s16, 1
      %p81 = por %p79, %p80
      %p82 = scmp.ne.s32.totalorder %s71, %s72
      %p83 = scmp.eq.s32.totalorder %s16, 0
      %p84 = por %p82, %p83
      %p85 = scmp.ne.s32.totalorder %s71, %s72
      %p86 = scmp.eq.s32.totalorder %s17, 1
      %p87 = por %p85, %p86
      %p89 = scmp.ne.s32.totalorder %s72, %s88
      %p90 = scmp.eq.s32.totalorder %s17, 0
      %p91 = por %p89, %p90
      %p92 = scmp.le.s32.totalorder 1, %s11
      %p93 = scmp.lt.s32.totalorder %s11, 3
      %p94 = pnand %p92, %p93
      %p95 = pneg %p94
      // Predicated region
      $region9: #{tpu_custom_call.1} parent=5 // pred_check
        _
      $region10: #{tpu_custom_call.1} parent=5 // pred_check_branch
        %97 = sbr.rel (%p94) target = $region12
      $region11: #{tpu_custom_call.1} parent=5 // pred_region
        %s98 = ssub.s32 %s11, 1
        // Predicated region
        $region13: #{tpu_custom_call.1} parent=11 // pred_check
          %p99 = pneg %p58
        $region14: #{tpu_custom_call.1} parent=11 // pred_check_branch
          %101 = sbr.rel (%p99) target = $region16
        $region15: #{tpu_custom_call.1} parent=11 // pred_region
          _
        $region16: #{tpu_custom_call.1} parent=11 // pred_fallthru
          _
      $region12: #{tpu_custom_call.1} parent=5 // pred_fallthru
        _
      %p102 = scmp.lt.s32.totalorder %s11, 2
      // Predicated region
      $region17: #{tpu_custom_call.1} parent=5 // pred_check
        %p103 = pneg %p102
      $region18: #{tpu_custom_call.1} parent=5 // pred_check_branch
        %105 = sbr.rel (%p103) target = $region20
      $region19: #{tpu_custom_call.1} parent=5 // pred_region
        // Predicated region
        $region21: #{tpu_custom_call.1} parent=19 // pred_check
          %p106 = pneg %p31
        $region22: #{tpu_custom_call.1} parent=19 // pred_check_branch
          %108 = sbr.rel (%p106) target = $region24
        $region23: #{tpu_custom_call.1} parent=19 // pred_region
          %p109 = scmp.lt.s32.totalorder %s11, 1
          %s110 = scalar_select %p109, %s11, 1
          %s111 = smul.addr %s110, 8
          %s112 = scalar_lea.vmem %s0, %s111
        $region24: #{tpu_custom_call.1} parent=19 // pred_fallthru
          _
      $region20: #{tpu_custom_call.1} parent=5 // pred_fallthru
        _
      %p113 = scmp.le.s32.totalorder 1, %s11
      %p114 = scmp.lt.s32.totalorder %s11, 3
      %p115 = pnand %p113, %p114
      %p116 = pneg %p115
      // Predicated region
      $region25: #{tpu_custom_call.1} parent=5 // pred_check
        _
      $region26: #{tpu_custom_call.1} parent=5 // pred_check_branch
        %118 = sbr.rel (%p115) target = $region28
      $region27: #{tpu_custom_call.1} parent=5 // pred_region
        %s119 = ssub.s32 %s11, 1
        %p120 = scmp.lt.s32.totalorder %s16, 1
        %s121 = scalar_select %p120, %s16, 1
        %s122 = smul.addr %s121, 8
        %s123 = scalar_lea.vmem %s0, %s122
        %p124 = pneg %p37
        %p125 = pneg %p34
        %p126 = pneg %p58
        %p127 = pneg %p55
        %p128 = pneg %p84
        %p129 = pneg %p81
        %s130 = sand.u32 %s71, 1
        %s131 = scalar_lea.sflag [#allocation3], %s130
        %s132 = sand.u32 %s71, 1
        %s133 = smul.addr %s132, 8
        %s134 = scalar_lea.vmem [#allocation2], %s133
        %p135 = scmp.lt.s32.totalorder %s16, 1
        %s136 = scalar_select %p135, %s16, 1
        %s137 = smul.addr %s136, 8
        %s138 = scalar_lea.vmem %s0, %s137
        %v139 = vld [vmem:[%s138] sm:$0xff]
        %v140 = vlaneseq
        %v141 = vand.u32 %v140, 127
        %142 = vset.pattern.permute.xlu0 0
        %143 = vperm.xlu0 %142, %v139
        %v144 = vpop.permute.xlu0 %143
        %vm145 = vcmp.eq.s32.totalorder %v141, %v144
        %v146 = vsel %vm145, 1, 0
        %v147 = vcvt.s32.f32 %v146
        %v148 = vld [vmem:[%s1] sm:$0xff]
        %v149 = vld [vmem:[%s1 + $0x8] sm:$0xff]
        %vm150 = vcmask 130048
        %v152 = vsel %vm150, %v147, 0
        %154 = vmatprep.subr.mxu0 0.0
        %155 = vmatpush1.msra.mxu0 %v148
        %156 = vmatprep.subr.mxu0 0.0
        %157 = vmatpush1.msra.mxu0 %v149
        %158 = vmatprep.subr.mxu0 0.0
        %159 = vmatpush1.msra.mxu0 0.0
        %160 = vmatprep.subr.mxu0 0.0
        %161 = vmatpush1.msra.mxu0 0.0
        %162 = vmatprep.subr.mxu0 0.0
        %163 = vmatpush1.msra.mxu0 0.0
        %164 = vmatprep.subr.mxu0 0.0
        %165 = vmatpush1.msra.mxu0 0.0
        %166 = vmatprep.subr.mxu0 0.0
        %167 = vmatpush1.msra.mxu0 0.0
        %168 = vmatprep.subr.mxu0 0.0
        %169 = vmatpush1.msra.mxu0 0.0
        %170 = vmatprep.subr.mxu0 0.0
        %171 = vmatpush1.msra.mxu0 0.0
        %172 = vmatprep.subr.mxu0 0.0
        %173 = vmatpush1.msra.mxu0 0.0
        %174 = vmatprep.subr.mxu0 0.0
        %175 = vmatpush1.msra.mxu0 0.0
        %176 = vmatprep.subr.mxu0 0.0
        %177 = vmatpush1.msra.mxu0 0.0
        %178 = vmatprep.subr.mxu0 0.0
        %179 = vmatpush1.msra.mxu0 0.0
        %180 = vmatprep.subr.mxu0 0.0
        %181 = vmatpush1.msra.mxu0 0.0
        %182 = vmatprep.subr.mxu0 0.0
        %183 = vmatpush1.msra.mxu0 0.0
        %184 = vmatprep.subr.mxu0 0.0
        %185 = vmatpush1.msra.mxu0 0.0
        %186 = vmatprep.subr.mxu0 0.0
        %187 = vmatpush1.msra.mxu0 0.0
        %188 = vmatprep.subr.mxu0 0.0
        %189 = vmatpush1.msra.mxu0 0.0
        %190 = vmatprep.subr.mxu0 0.0
        %191 = vmatpush1.msra.mxu0 0.0
        %192 = vmatprep.subr.mxu0 0.0
        %193 = vmatpush1.msra.mxu0 0.0
        %194 = vmatprep.subr.mxu0 0.0
        %195 = vmatpush1.msra.mxu0 0.0
        %196 = vmatprep.subr.mxu0 0.0
        %197 = vmatpush1.msra.mxu0 0.0
        %198 = vmatprep.subr.mxu0 0.0
        %199 = vmatpush1.msra.mxu0 0.0
        %200 = vmatprep.subr.mxu0 0.0
        %201 = vmatpush1.msra.mxu0 0.0
        %202 = vmatprep.subr.mxu0 0.0
        %203 = vmatpush1.msra.mxu0 0.0
        %204 = vmatprep.subr.mxu0 0.0
        %205 = vmatpush1.msra.mxu0 0.0
        %206 = vmatprep.subr.mxu0 0.0
        %207 = vmatpush1.msra.mxu0 0.0
        %208 = vmatprep.subr.mxu0 0.0
        %209 = vmatpush1.msra.mxu0 0.0
        %210 = vmatprep.subr.mxu0 0.0
        %211 = vmatpush1.msra.mxu0 0.0
        %212 = vmatprep.subr.mxu0 0.0
        %213 = vmatpush1.msra.mxu0 0.0
        %214 = vmatprep.subr.mxu0 0.0
        %215 = vmatpush1.msra.mxu0 0.0
        %216 = vmatprep.subr.mxu0 0.0
        %217 = vmatpush1.msra.mxu0 0.0
        %218 = vmatprep.mubr.f32.mxu0 0.0
        %219 = vmatmul.mubr.f32.gmra.mrb[0].mxu0 %v152
        %v220 = vpop.f32.mrb[0].mxu0
        %v221 = vadd.f32 0.0, %v220
        %v222 = vpop.f32.mrb[0].mxu0
        %223 = vdwg.mxu0
        %vm224 = vcmask 392192
        %225 = vst.msk [vmem:[%s134] sm:$0xff] %vm224, %v221
        %s226 = sand.u32 %s71, 1
        %s227 = scalar_lea.sflag [#allocation3], %s226
        %s228 = sand.u32 %s71, 1
        %s229 = smul.addr %s228, 8
        %s230 = scalar_lea.vmem [#allocation2], %s229
        // Predicated region
        $region29: #{tpu_custom_call.1} parent=27 // pred_check
          %p231 = pneg %p81
        $region30: #{tpu_custom_call.1} parent=27 // pred_check_branch
          %233 = sbr.rel (%p231) target = $region32
        $region31: #{tpu_custom_call.1} parent=27 // pred_region
          %s235 = ssub.s32 128, 128
          %236 = vsyncadd %s227, %s235
          %s237 = smul.addr %s16, 128
          %s238 = scalar_lea.hbm %s2, %s237
          %s240 = sshll.u32 %s230, 4
          %s241 = int_to_ptr.vmem [resolvable:$true] %s240
          %243 = dma.vmem_to_hbm [thread:$0]  %s241, 128, %s238, %s227
        $region32: #{tpu_custom_call.1} parent=27 // pred_fallthru
          _
      $region28: #{tpu_custom_call.1} parent=5 // pred_fallthru
        _
      %p244 = scmp.le.s32.totalorder 2, %s11
      // Predicated region
      $region33: #{tpu_custom_call.1} parent=5 // pred_check
        %p245 = pneg %p244
      $region34: #{tpu_custom_call.1} parent=5 // pred_check_branch
        %247 = sbr.rel (%p245) target = $region36
      $region35: #{tpu_custom_call.1} parent=5 // pred_region
        %s248 = ssub.s32 %s11, 2
        // Predicated region
        $region37: #{tpu_custom_call.1} parent=35 // pred_check
          %p249 = pneg %p87
        $region38: #{tpu_custom_call.1} parent=35 // pred_check_branch
          %251 = sbr.rel (%p249) target = $region40
        $region39: #{tpu_custom_call.1} parent=35 // pred_region
          %s252 = sand.u32 %s72, 1
          %s253 = scalar_lea.sflag [#allocation3], %s252
          %s254 = sand.u32 %s72, 1
          %s255 = smul.addr %s254, 8
          %s256 = scalar_lea.vmem [#allocation2], %s255
          %257 = dma.done %s253, 128
        $region40: #{tpu_custom_call.1} parent=35 // pred_fallthru
          _
      $region36: #{tpu_custom_call.1} parent=5 // pred_fallthru
        _
    $region6: #{tpu_custom_call.1} parent=1 // loop_footer
      %s15 = sadd.s32 1, %s11
    $region7: #{tpu_custom_call.1} parent=1 // loop_footer_branch
      %10 = sbr.rel target = $region3
    $region8: #{tpu_custom_call.1} parent=1 // loop_exit
      _
    %258 = vsyncpa [#allocation3], 1
    %s259 = scalar_lea.sflag [#allocation3], 1
    %260 = vsyncpa %s259, 1

</llo_original>
